<compile_context>
chip_gen: v7x
topology: tpu7x:2x2x1
jax: 0.10.0
libtpu: 0.0.40
codegen_flags: <defaults>
</compile_context>

<pallas_src>
import math

import jax
import jax.numpy as jnp
from jax.experimental import pallas as pl
from jax.experimental.pallas import tpu as pltpu


def _round_up(x, m):
    return ((x + m - 1) // m) * m


def _vmem_capacity_bytes():
    """Per-core VMEM capacity; conservative fallback if the query is unavailable."""
    try:
        cap = int(pltpu.get_tpu_info().vmem_capacity_bytes)
        if cap > 0:
            return cap
    except Exception:
        pass
    return 64 << 20  # v7x per-TensorCore VMEM (smallest across v5e/v6e/v7x)


# ---------------------------------------------------------------------------
# Phase 1: support = x @ w   (single 2-D GEMM over flattened (B*N, Fin) rows)
# ---------------------------------------------------------------------------
def _support_kernel(x_ref, w_ref, o_ref):
    # x_ref: (TMs, Fin), w_ref: (Fin, Fp), o_ref: (TMs, Fp)
    o_ref[...] = jnp.dot(
        x_ref[...], w_ref[...], preferred_element_type=jnp.float32
    ).astype(o_ref.dtype)


def _compute_support(x2d, w, compute_dtype):
    """x2d: (M, Fin), w: (Fin, Fp), both compute_dtype -> (M, Fp) compute_dtype."""
    M, Fin = x2d.shape
    Fp = w.shape[1]
    itemsize = jnp.dtype(compute_dtype).itemsize

    # M is a multiple of 8 by construction (N padded to >= 8): pick the largest row
    # tile that divides M.
    TMs = 8
    for cand in (1024, 512, 256, 128, 64, 32, 16, 8):
        if M % cand == 0:
            TMs = cand
            break
    # TODO(synk): tile Fin / Fp as well if Fin*Fp grows past a few MiB (not needed for
    # typical GCN feature widths).

    cap = _vmem_capacity_bytes()
    vmem_need = (2 * TMs * Fin + 2 * Fin * Fp + 2 * TMs * Fp) * itemsize
    vmem_limit = min(int(cap * 0.8), max(int(vmem_need * 1.5) + (1 << 20), 16 << 20))

    return pl.pallas_call(
        _support_kernel,
        out_shape=jax.ShapeDtypeStruct((M, Fp), compute_dtype),
        grid=(M // TMs,),
        in_specs=[
            pl.BlockSpec((TMs, Fin), lambda i: (i, 0)),
            pl.BlockSpec((Fin, Fp), lambda i: (0, 0)),   # resident across the grid
        ],
        out_specs=pl.BlockSpec((TMs, Fp), lambda i: (i, 0)),
        compiler_params=pltpu.CompilerParams(
            dimension_semantics=("parallel",),
            vmem_limit_bytes=vmem_limit,
        ),
    )(x2d, w)


# ---------------------------------------------------------------------------
# Phase 2: out = relu(adj @ support), K-tiled batched matmul
# ---------------------------------------------------------------------------
def _adj_spmm_relu_kernel(adj_ref, s_ref, o_ref, acc_ref):
    # adj_ref: (TM, TK)  compute dtype, streamed (dominant HBM traffic)
    # s_ref:   (TK, Fp)  compute dtype, streamed
    # o_ref:   (TM, Fp)  output dtype, Fp multiple of 128 (lane-dense stores)
    # acc_ref: (TM, Fp)  f32 accumulator, resident across the K axis
    k = pl.program_id(2)

    @pl.when(k == 0)
    def _():
        acc_ref[...] = jnp.zeros_like(acc_ref)

    acc_ref[...] += jnp.dot(
        adj_ref[...], s_ref[...], preferred_element_type=jnp.float32
    )

    @pl.when(k == pl.num_programs(2) - 1)
    def _():
        # ReLU on the VPU; unmasked lane-dense store.
        o_ref[...] = jnp.maximum(acc_ref[...], 0.0).astype(o_ref.dtype)


def _select_tiles(N, Fp, in_itemsize, out_itemsize, usable):
    """Pick (Np, TM, TK): padded N and row/K tiles whose working set fits `usable`."""
    def need(tm, tk):
        return (2 * tm * tk * in_itemsize        # adj tile, double-buffered
                + 2 * tk * Fp * in_itemsize      # support tile, double-buffered
                + tm * Fp * 4                    # f32 accumulator scratch
                + 2 * tm * Fp * out_itemsize)    # output tile, double-buffered

    n8 = _round_up(N, 8)
    if need(n8, n8) <= usable:
        # Small graph: one full adj row-block per step (grid = (B, 1, 1); the batch
        # axis is parallel so both TensorCores get work whenever B >= 2).
        return n8, n8, n8

    # Large graph: pad N to a multiple of 256 (bounded waste), then pick the largest
    # row / K tiles that divide Np and fit the budget (K-tiling caps VMEM vs N).
    np_ = _round_up(N, 256)
    tm = 8
    for cand in (512, 256, 128, 64, 32, 16, 8):
        if np_ % cand == 0 and need(cand, 128) <= usable:
            tm = cand
            break
    tk = 128
    for cand in (2048, 1024, 512, 256, 128):
        if np_ % cand == 0 and need(tm, cand) <= usable:
            tk = cand
            break
    return np_, tm, tk


def graph_convolution_gem(x, w, adj, *, compute_dtype=jnp.bfloat16):
    """relu(adj @ (x @ w)).  x: [B,N,Fin], w: [Fin,Fout], adj: [B,N,N] -> [B,N,Fout]."""
    B, N, Fin = x.shape
    Fin_w, Fout = w.shape
    assert Fin_w == Fin
    assert adj.shape == (B, N, N)
    out_dtype = x.dtype
    in_itemsize = jnp.dtype(compute_dtype).itemsize
    out_itemsize = jnp.dtype(out_dtype).itemsize

    cap = _vmem_capacity_bytes()
    usable = int(cap * 0.6)      # tile working-set budget; leave pipelining headroom

    # Lane-dense output: pad Fout to a multiple of 128.
    Fp = _round_up(Fout, 128)
    Np, TM, TK = _select_tiles(N, Fp, in_itemsize, out_itemsize, usable)

    # Zero padding is benign: padded adj/support entries are 0 and ReLU(0) = 0; padded
    # rows/cols are sliced off at the end.  Pads are skipped when shapes conform.
    w_c = w.astype(compute_dtype)
    if Fp != Fout:
        w_c = jnp.pad(w_c, ((0, 0), (0, Fp - Fout)))
    x_c = x.astype(compute_dtype)
    adj_c = adj.astype(compute_dtype)
    # TODO(synk): on v7x, casting adj to float8_e4m3 (row-normalized values in [0,1])
    # would halve the dominant HBM stream; kept bf16 here for cross-generation safety.
    if Np != N:
        x_c = jnp.pad(x_c, ((0, 0), (0, Np - N), (0, 0)))
        adj_c = jnp.pad(adj_c, ((0, 0), (0, Np - N), (0, Np - N)))

    # Phase 1: support = x @ w as one 2-D GEMM over all B*Np rows, hoisted out of the
    # adj kernel so x / w / support never occupy VMEM there.
    support = _compute_support(x_c.reshape(B * Np, Fin), w_c, compute_dtype)
    support = support.reshape(B, Np, Fp)

    # Phase 2: out = relu(adj @ support).
    vmem_need = (2 * TM * TK * in_itemsize + 2 * TK * Fp * in_itemsize
                 + TM * Fp * 4 + 2 * TM * Fp * out_itemsize)
    vmem_limit = min(int(cap * 0.8), max(int(vmem_need * 1.5) + (1 << 20), 16 << 20))

    grid = (B, Np // TM, Np // TK)
    out_p = pl.pallas_call(
        _adj_spmm_relu_kernel,
        out_shape=jax.ShapeDtypeStruct((B, Np, Fp), out_dtype),
        grid=grid,
        in_specs=[
            pl.BlockSpec((None, TM, TK), lambda b, r, k: (b, r, k)),   # adj (streamed)
            pl.BlockSpec((None, TK, Fp), lambda b, r, k: (b, k, 0)),   # support
        ],
        out_specs=pl.BlockSpec((None, TM, Fp), lambda b, r, k: (b, r, 0)),
        scratch_shapes=[pltpu.VMEM((TM, Fp), jnp.float32)],
        compiler_params=pltpu.CompilerParams(
            # batch and row axes are independent -> megacore-parallel (works even when
            # B == 1); the K axis carries the accumulator -> sequential.
            dimension_semantics=("parallel", "parallel", "arbitrary"),
            vmem_limit_bytes=vmem_limit,
        ),
    )(adj_c, support)

    if Np != N or Fp != Fout:
        # TODO(synk): fused consumers could take the padded (Np, Fp) block directly to
        # avoid this extra pass over the output stream.
        out_p = out_p[:, :N, :Fout]
    return out_p


def _xavier_uniform(key, fan_in, fan_out, dtype=jnp.float32):
    # torch.nn.init.xavier_uniform_ on a [out, in] weight; build W^T directly: [in, out].
    bound = math.sqrt(6.0 / (fan_in + fan_out))
    return jax.random.uniform(key, (fan_in, fan_out), dtype=dtype,
                              minval=-bound, maxval=bound)


def _reference(x, w, adj, compute_dtype=jnp.bfloat16):
    # Mirrors the kernel's bf16-input / f32-accumulate numerics.
    xc = x.astype(compute_dtype).astype(jnp.float32)
    wc = w.astype(compute_dtype).astype(jnp.float32)
    ac = adj.astype(compute_dtype).astype(jnp.float32)
    support = jnp.einsum("bnf,fo->bno", xc, wc)
    support = support.astype(compute_dtype).astype(jnp.float32)
    out = jnp.einsum("bmn,bno->bmo", ac, support)
    return jnp.maximum(out, 0.0)


if __name__ == "__main__":
    # TODO(synk): F.dropout with training=True is not implemented (module default
    # dropout=0.0 / eval mode makes it the identity, which is what this kernel does).
    B, N, Fin, Fout = 2, 8, 32, 16

    key = jax.random.PRNGKey(0)
    kx, ka, kw = jax.random.split(key, 3)

    x = jax.random.normal(kx, (B, N, Fin), dtype=jnp.float32)
    a = jax.random.uniform(ka, (B, N, N), dtype=jnp.float32)
    adj = a / jnp.sum(a, axis=-1, keepdims=True)   # row-normalized adjacency-like
    w = _xavier_uniform(kw, Fin, Fout)

    out = graph_convolution_gem(x, w, adj)
    out = jax.block_until_ready(out)

    ref = _reference(x, w, adj)
    assert out.shape == (B, N, Fout)
    assert jnp.allclose(out, ref, atol=5e-3, rtol=5e-3), \
        float(jnp.max(jnp.abs(out - ref)))

    print("KERNEL_OK")
</pallas_src>

<mosaic_0001>
module attributes {stable_mosaic.version = 11 : i64} {
  func.func @_support_kernel(%arg0: i32, %arg1: memref<16x32xbf16, #tpu.memory_space<vmem>>, %arg2: memref<32x128xbf16, #tpu.memory_space<vmem>>, %arg3: memref<16x128xbf16, #tpu.memory_space<vmem>>) attributes {dimension_semantics = [#tpu.dimension_semantics<parallel>], iteration_bounds = array<i64: 1>, scalar_prefetch = 0 : i64, scratch_operands = 0 : i64, tpu.core_type = #tpu.core_type<tc>, window_params = [{transform_indices = @transform_0, window_bounds = array<i64: 16, 32>}, {pipeline_mode = #tpu.pipeline_mode<synchronous>, transform_indices = @transform_1, window_bounds = array<i64: 32, 128>}, {transform_indices = @transform_2, window_bounds = array<i64: 16, 128>}]} {
    %c0 = arith.constant 0 : index
    %c0_0 = arith.constant 0 : index
    %0 = vector.load %arg1[%c0, %c0_0] : memref<16x32xbf16, #tpu.memory_space<vmem>>, vector<16x32xbf16>
    %c0_1 = arith.constant 0 : index
    %c0_2 = arith.constant 0 : index
    %1 = vector.load %arg2[%c0_1, %c0_2] : memref<32x128xbf16, #tpu.memory_space<vmem>>, vector<32x128xbf16>
    %cst = arith.constant dense<0.000000e+00> : vector<16x128xf32>
    %2 = tpu.matmul %0, %1, %cst {dimension_numbers = #tpu.dot_dimension_numbers<[1], [0], [0], [1], [0, 0, 1, 1], [], []>} : vector<16x32xbf16>, vector<32x128xbf16>, vector<16x128xf32> -> vector<16x128xf32>
    %3 = arith.truncf %2 : vector<16x128xf32> to vector<16x128xbf16>
    %c0_3 = arith.constant 0 : index
    %c0_4 = arith.constant 0 : index
    %4 = vector.load %arg3[%c0_3, %c0_4] : memref<16x128xbf16, #tpu.memory_space<vmem>>, vector<16x128xbf16>
    tpu.vector_store %arg3[%c0_3, %c0_4], %3 {strides = array<i32>} : memref<16x128xbf16, #tpu.memory_space<vmem>>, vector<16x128xbf16>,
    return
  }
  func.func @transform_0(%arg0: i32) -> (i32, i32) {
    %c0_i32 = arith.constant 0 : i32
    %c0_i32_0 = arith.constant 0 : i32
    return %arg0, %c0_i32 : i32, i32
  }
  func.func @transform_1(%arg0: i32) -> (i32, i32) {
    %c0_i32 = arith.constant 0 : i32
    %c0_i32_0 = arith.constant 0 : i32
    %c0_i32_1 = arith.constant 0 : i32
    return %c0_i32, %c0_i32_0 : i32, i32
  }
  func.func @transform_2(%arg0: i32) -> (i32, i32) {
    %c0_i32 = arith.constant 0 : i32
    %c0_i32_0 = arith.constant 0 : i32
    return %arg0, %c0_i32 : i32, i32
  }
}

</mosaic_0001>

<llo_original>
// kernel: tpu_custom_call.1
$region0: #{tpu_custom_call.1}
  #allocation0 [shape = 'u32[]', space=smem, size = 0x4, offset = 0x4, fixed_abs, tag = 'smem constant byte address 0x4 - core index']
  #allocation1 [shape = 'u32[144,128]{1,0:T(1,128)}', space=vmem, size = 0x12000, scoped, tag = 'internal scratch']
  %s0 = inlined_call_operand.hbm [shape: bf16[16,32], index: 0, kind: input, shape index: {}]
  %s1 = inlined_call_operand.hbm [shape: bf16[32,128], index: 1, kind: input, shape index: {}]
  %s2 = inlined_call_operand.hbm [shape: bf16[16,128], index: 2, kind: output, shape index: {}]
  %s3 = sld [smem:[#allocation0]]
  $region26: #{tpu_custom_call.1} parent=0
    _
  %s5 = ssub.s32 1, %s3
  %s6 = scalar_select 0, %s5, %s3
  $region1: #{tpu_custom_call.1} parent=0
    #allocation2 [shape = 'u8[4096]{0}', space=vmem, size = 0x1000, scoped, tag = 'input window, operand 0, single buffered']
    #allocation3 [shape = 's32[1]{0}', space=sflag, size = 0x4, scoped, tag = 'scoped memory for tpu_custom_call.1']
    #allocation4 [shape = 's32[1]{0}', space=sflag, size = 0x4, scoped, tag = 'scoped memory for tpu_custom_call.1']
    #allocation5 [shape = 'u8[8192]{0}', space=vmem, size = 0x2000, scoped, tag = 'input window, operand 1, single buffered']
    #allocation6 [shape = 's32[1]{0}', space=sflag, size = 0x4, scoped, tag = 'scoped memory for tpu_custom_call.1']
    #allocation7 [shape = 'u8[4096]{0}', space=vmem, size = 0x1000, scoped, tag = 'output window, operand 0, single buffered']
    %7 = vsyncpa [#allocation3], 0
    %8 = vsyncpa [#allocation6], 0
    %9 = vsyncpa [#allocation4], 0
    // Predicated region
    $region2: #{tpu_custom_call.1} parent=1 // pred_check
      _
    $region3: #{tpu_custom_call.1} parent=1 // pred_check_branch
      %11 = sbr.rel (0) target = $region5
    $region4: #{tpu_custom_call.1} parent=1 // pred_region
      %s13 = ssub.s32 128, 128
      %14 = vsyncadd [#allocation3], %s13
      %s15 = sshll.u32 [#allocation2], 4
      %s16 = int_to_ptr.vmem [resolvable:$true] %s15
      %21 = dma.hbm_to_vmem [thread:$0]  %s0, 128, %s16, [#allocation3], 64, 64, 4
    $region5: #{tpu_custom_call.1} parent=1 // pred_fallthru
      _
    // Predicated region
    $region6: #{tpu_custom_call.1} parent=1 // pred_check
      _
    $region7: #{tpu_custom_call.1} parent=1 // pred_check_branch
      %23 = sbr.rel (0) target = $region9
    $region8: #{tpu_custom_call.1} parent=1 // pred_region
      %s25 = ssub.s32 256, 256
      %26 = vsyncadd [#allocation6], %s25
      %s27 = sshll.u32 [#allocation5], 4
      %s28 = int_to_ptr.vmem [resolvable:$true] %s27
      %33 = dma.hbm_to_vmem [thread:$0]  %s1, 256, %s28, [#allocation6], 64, 64, 4
    $region9: #{tpu_custom_call.1} parent=1 // pred_fallthru
      _
    // Predicated region
    $region10: #{tpu_custom_call.1} parent=1 // pred_check
      _
    $region11: #{tpu_custom_call.1} parent=1 // pred_check_branch
      %35 = sbr.rel (0) target = $region13
    $region12: #{tpu_custom_call.1} parent=1 // pred_region
      %36 = dma.done [#allocation3], 128
    $region13: #{tpu_custom_call.1} parent=1 // pred_fallthru
      _
    // Predicated region
    $region14: #{tpu_custom_call.1} parent=1 // pred_check
      _
    $region15: #{tpu_custom_call.1} parent=1 // pred_check_branch
      %38 = sbr.rel (0) target = $region17
    $region16: #{tpu_custom_call.1} parent=1 // pred_region
      %39 = dma.done [#allocation6], 256
    $region17: #{tpu_custom_call.1} parent=1 // pred_fallthru
      _
    %v41 = vld [vmem:[#allocation2] sm:$0xf]
    %v42 = vld [vmem:[#allocation2 + $0x4] sm:$0xf]
    %v43 = vld [vmem:[#allocation5] sm:$0xf]
    %v44 = vld [vmem:[#allocation5 + $0x4] sm:$0xf]
    %v45 = vld [vmem:[#allocation5 + $0x8] sm:$0xf]
    %v46 = vld [vmem:[#allocation5 + $0xc] sm:$0xf]
    %v49 = vunpack.c.l.b16 %v41
    %v50 = vunpack.c.l.b16 %v42
    %v51 = vpack.c.b16 %v50, %v49
    %v56 = vunpack.c.l.b16 %v43
    %v57 = vunpack.c.l.b16 %v44
    %v58 = vunpack.c.l.b16 %v45
    %v59 = vunpack.c.l.b16 %v46
    %v60 = vpack.c.b16 %v57, %v56
    %v61 = vpack.c.b16 %v59, %v58
    %vm64 = vcmask 261120
    %v66 = vsel %vm64, %v51, 0
    %68 = vmatprep.subr.bf16.mxu0 0
    %69 = vmatpush1.bf16.msra.mxu0 %v60
    %70 = vmatprep.subr.bf16.mxu0 0
    %71 = vmatpush1.bf16.msra.mxu0 %v61
    %72 = vmatprep.subr.bf16.mxu0 0
    %73 = vmatpush1.bf16.msra.mxu0 0
    %74 = vmatprep.subr.bf16.mxu0 0
    %75 = vmatpush1.bf16.msra.mxu0 0
    %76 = vmatprep.subr.bf16.mxu0 0
    %77 = vmatpush1.bf16.msra.mxu0 0
    %78 = vmatprep.subr.bf16.mxu0 0
    %79 = vmatpush1.bf16.msra.mxu0 0
    %80 = vmatprep.subr.bf16.mxu0 0
    %81 = vmatpush1.bf16.msra.mxu0 0
    %82 = vmatprep.subr.bf16.mxu0 0
    %83 = vmatpush1.bf16.msra.mxu0 0
    %84 = vmatprep.subr.bf16.mxu0 0
    %85 = vmatpush1.bf16.msra.mxu0 0
    %86 = vmatprep.subr.bf16.mxu0 0
    %87 = vmatpush1.bf16.msra.mxu0 0
    %88 = vmatprep.subr.bf16.mxu0 0
    %89 = vmatpush1.bf16.msra.mxu0 0
    %90 = vmatprep.subr.bf16.mxu0 0
    %91 = vmatpush1.bf16.msra.mxu0 0
    %92 = vmatprep.subr.bf16.mxu0 0
    %93 = vmatpush1.bf16.msra.mxu0 0
    %94 = vmatprep.subr.bf16.mxu0 0
    %95 = vmatpush1.bf16.msra.mxu0 0
    %96 = vmatprep.subr.bf16.mxu0 0
    %97 = vmatpush1.bf16.msra.mxu0 0
    %98 = vmatprep.subr.bf16.mxu0 0
    %99 = vmatpush1.bf16.msra.mxu0 0
    %100 = vmatprep.mubr.bf16.mxu0 0
    %101 = vmatmul.mubr.bf16.gmra.mrb[0].mxu0 %v66
    %v102 = vpop.f32.mrb[0].mxu0
    %v103 = vadd.f32 0.0, %v102
    %v104 = vpop.f32.mrb[0].mxu0
    %v105 = vpop.f32.mrb[0].mxu0
    %v106 = vadd.f32 0.0, %v105
    %v107 = vpop.f32.mrb[0].mxu0
    %108 = vdwg.mxu0
    %v109 = vpack.c.bf16 %v106, %v103
    %v111 = vunpack.c.l.b16 %v109
    %v112 = vunpack.c.h.b16 %v109
    %v113 = vpack.c.b16 %v111, %v111
    %v114 = vpack.c.b16 %v112, %v112
    %117 = vst [vmem:[#allocation7] sm:$0xf] %v113
    %118 = vst [vmem:[#allocation7 + $0x4] sm:$0xf] %v114
    // Predicated region
    $region18: #{tpu_custom_call.1} parent=1 // pred_check
      _
    $region19: #{tpu_custom_call.1} parent=1 // pred_check_branch
      %120 = sbr.rel (0) target = $region21
    $region20: #{tpu_custom_call.1} parent=1 // pred_region
      %s122 = ssub.s32 128, 128
      %123 = vsyncadd [#allocation4], %s122
      %s124 = sshll.u32 [#allocation7], 4
      %s125 = int_to_ptr.vmem [resolvable:$true] %s124
      %130 = dma.vmem_to_hbm [thread:$0]  %s125, 128, %s2, [#allocation4], 64, 64, 4
    $region21: #{tpu_custom_call.1} parent=1 // pred_fallthru
      _
    // Predicated region
    $region22: #{tpu_custom_call.1} parent=1 // pred_check
      _
    $region23: #{tpu_custom_call.1} parent=1 // pred_check_branch
      %132 = sbr.rel (0) target = $region25
    $region24: #{tpu_custom_call.1} parent=1 // pred_region
      %133 = dma.done [#allocation4], 128
    $region25: #{tpu_custom_call.1} parent=1 // pred_fallthru
      _
    %134 = vsyncpa [#allocation3], 1
    %135 = vsyncpa [#allocation6], 1
    %136 = vsyncpa [#allocation4], 1

</llo_original>
